<compile_context>
chip_gen: v7x
topology: tpu7x:2x2x1
jax: 0.10.0
libtpu: 0.0.40
codegen_flags: <defaults>
</compile_context>

<pallas_src>
import functools

import jax
import jax.numpy as jnp
from jax.experimental import pallas as pl
from jax.experimental.pallas import tpu as pltpu


def _ds(start, size, stride):
    """pl.ds helper: plain slice when stride == 1, strided slice otherwise."""
    return pl.ds(start, size) if stride == 1 else pl.ds(start, size, stride=stride)


def _maxpool_kernel(x_ref, o_ref, t_ref, *, ksize, stride):
    """Separable max pool on one block of planes.

    x_ref : (p_tile, H, W)          input block (native NCHW-derived layout)
    o_ref : (p_tile, H_out, W_out)  output block
    t_ref : (W, p_tile * H_out)     VMEM scratch: row-pooled block with W on
                                    sublanes so the column pool can also use
                                    strided sublane loads (never lane strides)
    """
    p, h_out, w_out = o_ref.shape
    w = x_ref.shape[2]

    # ---- pool along H (sublane dim): strided ref loads + VPU max tree ----
    rows = [x_ref[:, _ds(kh, h_out, stride), :] for kh in range(ksize)]
    xh = functools.reduce(jnp.maximum, rows)              # (p, H_out, W)

    # ---- one 2-D XLU transpose so W sits on sublanes --------------------
    t_ref[...] = xh.reshape(p * h_out, w).T               # (W, p*H_out)

    # ---- pool along W (now sublanes): strided ref loads + VPU max tree ---
    cols = [t_ref[_ds(kw, w_out, stride), :] for kw in range(ksize)]
    ow = functools.reduce(jnp.maximum, cols)               # (W_out, p*H_out)

    # ---- transpose back and store the lane-dense NCHW-layout output -----
    o_ref[...] = ow.T.reshape(p, h_out, w_out)


def _pad_to(value, multiple):
    return ((value + multiple - 1) // multiple) * multiple


def _vmem_plan(h, w, h_out, w_out, itemsize):
    """Per-plane VMEM bytes (padded to (8,128) vreg tiles) + chip-aware budget."""
    in_plane = _pad_to(h, 8) * _pad_to(w, 128)            # input block (x2 buffers)
    out_plane = _pad_to(h_out, 8) * _pad_to(w_out, 128)   # output block (x2 buffers)
    mid_plane = _pad_to(h_out, 8) * _pad_to(w, 128)       # row-pooled value xh
    scr_plane = _pad_to(w, 8) * h_out                     # transposed scratch
    per_plane = itemsize * (
        2 * in_plane + 2 * out_plane + 2 * mid_plane + 2 * scr_plane + 2 * out_plane
    )

    try:
        vmem_cap = int(pltpu.get_tpu_info().vmem_capacity_bytes)
    except Exception:  # defensive: unknown backend / older API
        vmem_cap = 64 * 2**20

    if vmem_cap >= 96 * 2**20:
        # v5e / v6e: 128 MiB physical VMEM, single TensorCore -> big blocks.
        budget, limit_cap, two_cores = 64 * 2**20, 100 * 2**20, False
    else:
        # v7x: 64 MiB physical VMEM, two TensorCores -> headroom + even steps.
        budget, limit_cap, two_cores = 26 * 2**20, 48 * 2**20, True
    return max(1, per_plane), budget, limit_cap, two_cores


def _choose_plane_tile(planes, per_plane_bytes, budget_bytes, prefer_even_steps):
    """Largest exact divisor of `planes` whose block set fits the VMEM budget.

    On 2-TensorCore chips prefer a divisor giving an even (>= 2) step count so
    the 'parallel' grid axis splits evenly across the cores; on single-TC
    chips just take the largest tile that fits (fewest, biggest DMAs).
    """
    max_tile = max(1, int(budget_bytes // per_plane_bytes))
    best_any = 1
    for d in range(min(planes, max_tile), 0, -1):
        if planes % d == 0:
            if not prefer_even_steps:
                return d
            if (planes // d) % 2 == 0:
                return d
            best_any = max(best_any, d)
    return best_any


def max_pool_2d(x, kernel_size, stride=None):
    """Pallas TPU max pool, NCHW in -> NCHW out (same semantics as nn.MaxPool2d)."""
    if stride is None:
        stride = kernel_size  # nn.MaxPool2d default
    assert kernel_size >= 1 and stride >= 1
    n, c, h, w = x.shape
    assert h >= kernel_size and w >= kernel_size, "input smaller than pooling window"
    h_out = (h - kernel_size) // stride + 1
    w_out = (w - kernel_size) // stride + 1
    planes = n * c
    itemsize = x.dtype.itemsize

    per_plane, budget, limit_cap, two_cores = _vmem_plan(h, w, h_out, w_out, itemsize)
    # TODO(synk): add spatial (H) tiling for inputs so large that a single
    # plane's blocks exceed the VMEM budget; pose-classification inputs are
    # far below that.
    p_tile = _choose_plane_tile(planes, per_plane, budget, two_cores and planes > 1)
    assert planes % p_tile == 0, (planes, p_tile)
    grid = (planes // p_tile,)

    vmem_limit = int(min(limit_cap, max(32 * 2**20, p_tile * per_plane + 4 * 2**20)))

    kernel = functools.partial(_maxpool_kernel, ksize=kernel_size, stride=stride)
    cost = pl.CostEstimate(
        flops=int(planes * (kernel_size - 1) * (h_out * w + h_out * w_out)),
        transcendentals=0,
        bytes_accessed=int(planes * (h * w + h_out * w_out) * itemsize),
    )

    out = pl.pallas_call(
        kernel,
        out_shape=jax.ShapeDtypeStruct((planes, h_out, w_out), x.dtype),
        grid_spec=pltpu.PrefetchScalarGridSpec(
            num_scalar_prefetch=0,
            grid=grid,
            in_specs=[pl.BlockSpec((p_tile, h, w), lambda i: (i, 0, 0))],
            out_specs=pl.BlockSpec((p_tile, h_out, w_out), lambda i: (i, 0, 0)),
            scratch_shapes=[pltpu.VMEM((w, p_tile * h_out), x.dtype)],
        ),
        compiler_params=pltpu.CompilerParams(
            dimension_semantics=("parallel",),
            vmem_limit_bytes=vmem_limit,
        ),
        cost_estimate=cost,
    )(x.reshape(planes, h, w))

    # (planes, H_out, W_out) -> NCHW (pure reshape, no data movement).
    return out.reshape(n, c, h_out, w_out)


def _reference_maxpool(x, kernel_size, stride):
    # Pure-JAX reference (lax.reduce_window) for correctness checking.
    return jax.lax.reduce_window(
        x,
        -jnp.inf,
        jax.lax.max,
        window_dimensions=(1, 1, kernel_size, kernel_size),
        window_strides=(1, 1, stride, stride),
        padding="VALID",
    )


if __name__ == "__main__":
    # MaxPool(kernel_size=2, stride=2) on an NCHW input.
    kernel_size, stride = 2, 2
    key = jax.random.PRNGKey(0)
    x = jax.random.normal(key, (2, 4, 16, 16), dtype=jnp.float32)

    out = jax.block_until_ready(max_pool_2d(x, kernel_size, stride))

    ref = _reference_maxpool(x, kernel_size, stride)
    assert out.shape == ref.shape == (2, 4, 8, 8), out.shape
    assert jnp.allclose(out, ref), "Pallas max-pool mismatch vs lax.reduce_window"

    print("KERNEL_OK")
</pallas_src>

<mosaic_0001>
module attributes {stable_mosaic.version = 11 : i64} {
  func.func @_maxpool_kernel(%arg0: i32, %arg1: memref<4x16x16xf32, #tpu.memory_space<vmem>>, %arg2: memref<4x8x8xf32, #tpu.memory_space<vmem>>, %arg3: memref<16x32xf32, #tpu.memory_space<vmem>>) attributes {dimension_semantics = [#tpu.dimension_semantics<parallel>], iteration_bounds = array<i64: 2>, scalar_prefetch = 0 : i64, scratch_operands = 1 : i64, tpu.core_type = #tpu.core_type<tc>, window_params = [{transform_indices = @transform_0, window_bounds = array<i64: 4, 16, 16>}, {transform_indices = @transform_1, window_bounds = array<i64: 4, 8, 8>}]} {
    %c0 = arith.constant 0 : index
    %c0_0 = arith.constant 0 : index
    %c0_1 = arith.constant 0 : index
    %0 = tpu.strided_load %arg1[%c0, %c0_0, %c0_1] {strides = array<i32: 1, 2, 1>} : memref<4x16x16xf32, #tpu.memory_space<vmem>>, vector<4x8x16xf32>
    %c0_2 = arith.constant 0 : index
    %c1 = arith.constant 1 : index
    %c0_3 = arith.constant 0 : index
    %1 = tpu.strided_load %arg1[%c0_2, %c1, %c0_3] {strides = array<i32: 1, 2, 1>} : memref<4x16x16xf32, #tpu.memory_space<vmem>>, vector<4x8x16xf32>
    %2 = arith.maximumf %0, %1 : vector<4x8x16xf32>
    %3 = vector.shape_cast %2 : vector<4x8x16xf32> to vector<32x16xf32>
    %4 = tpu.transpose %3, [1, 0] : vector<32x16xf32> -> vector<16x32xf32>
    %c0_4 = arith.constant 0 : index
    %c0_5 = arith.constant 0 : index
    %5 = vector.load %arg3[%c0_4, %c0_5] : memref<16x32xf32, #tpu.memory_space<vmem>>, vector<16x32xf32>
    tpu.vector_store %arg3[%c0_4, %c0_5], %4 {strides = array<i32>} : memref<16x32xf32, #tpu.memory_space<vmem>>, vector<16x32xf32>,
    %c0_6 = arith.constant 0 : index
    %c0_7 = arith.constant 0 : index
    %6 = tpu.strided_load %arg3[%c0_6, %c0_7] {strides = array<i32: 2, 1>} : memref<16x32xf32, #tpu.memory_space<vmem>>, vector<8x32xf32>
    %c1_8 = arith.constant 1 : index
    %c0_9 = arith.constant 0 : index
    %7 = tpu.strided_load %arg3[%c1_8, %c0_9] {strides = array<i32: 2, 1>} : memref<16x32xf32, #tpu.memory_space<vmem>>, vector<8x32xf32>
    %8 = arith.maximumf %6, %7 : vector<8x32xf32>
    %9 = tpu.transpose %8, [1, 0] : vector<8x32xf32> -> vector<32x8xf32>
    %10 = vector.shape_cast %9 : vector<32x8xf32> to vector<4x8x8xf32>
    %c0_10 = arith.constant 0 : index
    %c0_11 = arith.constant 0 : index
    %c0_12 = arith.constant 0 : index
    %11 = vector.load %arg2[%c0_10, %c0_11, %c0_12] : memref<4x8x8xf32, #tpu.memory_space<vmem>>, vector<4x8x8xf32>
    tpu.vector_store %arg2[%c0_10, %c0_11, %c0_12], %10 {strides = array<i32>} : memref<4x8x8xf32, #tpu.memory_space<vmem>>, vector<4x8x8xf32>,
    return
  }
  func.func @transform_0(%arg0: i32) -> (i32, i32, i32) {
    %c0_i32 = arith.constant 0 : i32
    %c0_i32_0 = arith.constant 0 : i32
    %c0_i32_1 = arith.constant 0 : i32
    return %arg0, %c0_i32, %c0_i32_0 : i32, i32, i32
  }
  func.func @transform_1(%arg0: i32) -> (i32, i32, i32) {
    %c0_i32 = arith.constant 0 : i32
    %c0_i32_0 = arith.constant 0 : i32
    %c0_i32_1 = arith.constant 0 : i32
    return %arg0, %c0_i32, %c0_i32_0 : i32, i32, i32
  }
}

</mosaic_0001>

<llo_original>
// kernel: tpu_custom_call.1
$region0: #{tpu_custom_call.1}
  #allocation0 [shape = 'u32[]', space=smem, size = 0x4, offset = 0x4, fixed_abs, tag = 'smem constant byte address 0x4 - core index']
  #allocation1 [shape = 'u32[144,128]{1,0:T(1,128)}', space=vmem, size = 0x12000, scoped, tag = 'internal scratch']
  #allocation2 [shape = 'f32[16,32]{1,0:T(8,128)}', space=vmem, size = 0x2000, scoped, tag = 'scratch operand']
  %s0 = inlined_call_operand.hbm [shape: f32[8,16,16], index: 0, kind: input, shape index: {}]
  %s1 = inlined_call_operand.hbm [shape: f32[8,8,8], index: 1, kind: output, shape index: {}]
  %s2 = sld [smem:[#allocation0]]
  $region41: #{tpu_custom_call.1} parent=0
    _
  %s4 = ssub.s32 1, %s2
  %s5 = scalar_select 0, %s4, %s2
  $region1: #{tpu_custom_call.1} parent=0
    #allocation3 [shape = 'u8[65536]{0}', space=vmem, size = 0x10000, scoped, tag = 'input window, operand 0']
    #allocation4 [shape = 's32[2]{0}', space=sflag, size = 0x8, scoped, tag = 'scoped memory for tpu_custom_call.1']
    #allocation5 [shape = 's32[2]{0}', space=sflag, size = 0x8, scoped, tag = 'scoped memory for tpu_custom_call.1']
    #allocation6 [shape = 'u8[32768]{0}', space=vmem, size = 0x8000, scoped, tag = 'output window, operand 0']
    %6 = vsyncpa [#allocation4], 0
    %s7 = scalar_lea.sflag [#allocation4], 1
    %8 = vsyncpa %s7, 0
    %9 = vsyncpa [#allocation5], 0
    %s10 = scalar_lea.sflag [#allocation5], 1
    %11 = vsyncpa %s10, 0
    loop: start=0, step=1, limit=4
    $region2: #{tpu_custom_call.1} parent=1 // loop_pre_header
      _
    $region3: #{tpu_custom_call.1} parent=1 // loop_header
      %s13 = sphi 0, %s17
      %p14 = scmp.ge.s32.totalorder %s13, 4
      %s23 = sphi 0, %s25
      %s26 = sphi 0, %s23
      %s27 = sphi 0, %s26
      %s43 = sphi 0, %s27
      %s49 = sphi 0, %s51
      %s52 = sphi 0, %s49
      %s53 = sphi 0, %s52
      %s69 = sphi 0, %s53
    $region4: #{tpu_custom_call.1} parent=1 // loop_header_branch
      %16 = sbr.rel (%p14) target = $region8
    $region5: #{tpu_custom_call.1} parent=1 // loop_body
      %s18 = ssub.s32 %s13, 1
      %s19 = ssub.s32 %s13, 2
      %s20 = sadd.s32 %s13, 1
      %s21 = ssub.s32 %s13, %s20
      %p22 = scmp.eq.s32.totalorder %s21, 0
      %s24 = sadd.s32 %s23, 1
      %s25 = scalar_select %p22, %s23, %s24
      %p28 = pneg %p22
      %p29 = scmp.eq.s32.totalorder %s13, 1
      %p30 = por %p28, %p29
      %p31 = scmp.ne.s32.totalorder %s23, %s26
      %p32 = scmp.eq.s32.totalorder %s13, 0
      %p33 = por %p31, %p32
      %p34 = scmp.ne.s32.totalorder %s23, %s26
      %p35 = scmp.eq.s32.totalorder %s18, 1
      %p36 = por %p34, %p35
      %p37 = scmp.ne.s32.totalorder %s26, %s27
      %p38 = scmp.eq.s32.totalorder %s18, 0
      %p39 = por %p37, %p38
      %p40 = scmp.ne.s32.totalorder %s26, %s27
      %p41 = scmp.eq.s32.totalorder %s19, 1
      %p42 = por %p40, %p41
      %p44 = scmp.ne.s32.totalorder %s27, %s43
      %p45 = scmp.eq.s32.totalorder %s19, 0
      %p46 = por %p44, %p45
      %s47 = ssub.s32 %s13, %s20
      %p48 = scmp.eq.s32.totalorder %s47, 0
      %s50 = sadd.s32 %s49, 1
      %s51 = scalar_select %p48, %s49, %s50
      %p54 = pneg %p48
      %p55 = scmp.eq.s32.totalorder %s13, 1
      %p56 = por %p54, %p55
      %p57 = scmp.ne.s32.totalorder %s49, %s52
      %p58 = scmp.eq.s32.totalorder %s13, 0
      %p59 = por %p57, %p58
      %p60 = scmp.ne.s32.totalorder %s49, %s52
      %p61 = scmp.eq.s32.totalorder %s18, 1
      %p62 = por %p60, %p61
      %p63 = scmp.ne.s32.totalorder %s52, %s53
      %p64 = scmp.eq.s32.totalorder %s18, 0
      %p65 = por %p63, %p64
      %p66 = scmp.ne.s32.totalorder %s52, %s53
      %p67 = scmp.eq.s32.totalorder %s19, 1
      %p68 = por %p66, %p67
      %p70 = scmp.ne.s32.totalorder %s53, %s69
      %p71 = scmp.eq.s32.totalorder %s19, 0
      %p72 = por %p70, %p71
      %p73 = scmp.le.s32.totalorder 1, %s13
      %p74 = scmp.lt.s32.totalorder %s13, 3
      %p75 = pnand %p73, %p74
      %p76 = pneg %p75
      // Predicated region
      $region9: #{tpu_custom_call.1} parent=5 // pred_check
        _
      $region10: #{tpu_custom_call.1} parent=5 // pred_check_branch
        %78 = sbr.rel (%p75) target = $region12
      $region11: #{tpu_custom_call.1} parent=5 // pred_region
        %s79 = ssub.s32 %s13, 1
      $region12: #{tpu_custom_call.1} parent=5 // pred_fallthru
        _
      %p80 = scmp.lt.s32.totalorder %s13, 2
      // Predicated region
      $region13: #{tpu_custom_call.1} parent=5 // pred_check
        %p81 = pneg %p80
      $region14: #{tpu_custom_call.1} parent=5 // pred_check_branch
        %83 = sbr.rel (%p81) target = $region16
      $region15: #{tpu_custom_call.1} parent=5 // pred_region
        // Predicated region
        $region17: #{tpu_custom_call.1} parent=15 // pred_check
          %p84 = pneg %p33
        $region18: #{tpu_custom_call.1} parent=15 // pred_check_branch
          %86 = sbr.rel (%p84) target = $region20
        $region19: #{tpu_custom_call.1} parent=15 // pred_region
          %s87 = sand.u32 %s23, 1
          %s88 = scalar_lea.sflag [#allocation4], %s87
          %s89 = sand.u32 %s23, 1
          %s90 = smul.addr %s89, 64
          %s91 = scalar_lea.vmem [#allocation3], %s90
          %s92 = smul.u32 4, %s13
          %s94 = ssub.s32 1024, 1024
          %95 = vsyncadd %s88, %s94
          %s96 = smul.addr %s92, 2
          %s97 = smul.addr %s96, 128
          %s98 = scalar_lea.hbm %s0, %s97
          %s99 = sshll.u32 %s91, 4
          %s100 = int_to_ptr.vmem [resolvable:$true] %s99
          %105 = dma.hbm_to_vmem [thread:$0]  %s98, 1024, %s100, %s88, 128, 128, 8
        $region20: #{tpu_custom_call.1} parent=15 // pred_fallthru
          _
      $region16: #{tpu_custom_call.1} parent=5 // pred_fallthru
        _
      %p106 = scmp.le.s32.totalorder 1, %s13
      %p107 = scmp.lt.s32.totalorder %s13, 3
      %p108 = pnand %p106, %p107
      %p109 = pneg %p108
      // Predicated region
      $region21: #{tpu_custom_call.1} parent=5 // pred_check
        _
      $region22: #{tpu_custom_call.1} parent=5 // pred_check_branch
        %111 = sbr.rel (%p108) target = $region24
      $region23: #{tpu_custom_call.1} parent=5 // pred_region
        %s112 = ssub.s32 %s13, 1
        %s113 = sand.u32 %s26, 1
        %s114 = scalar_lea.sflag [#allocation4], %s113
        %s115 = sand.u32 %s26, 1
        %s116 = smul.addr %s115, 64
        %s117 = scalar_lea.vmem [#allocation3], %s116
        // Predicated region
        $region25: #{tpu_custom_call.1} parent=23 // pred_check
          %p118 = pneg %p39
        $region26: #{tpu_custom_call.1} parent=23 // pred_check_branch
          %120 = sbr.rel (%p118) target = $region28
        $region27: #{tpu_custom_call.1} parent=23 // pred_region
          %121 = dma.done %s114, 1024
        $region28: #{tpu_custom_call.1} parent=23 // pred_fallthru
          _
        %s122 = sand.u32 %s26, 1
        %s123 = scalar_lea.sflag [#allocation4], %s122
        %s124 = sand.u32 %s26, 1
        %s125 = smul.addr %s124, 64
        %s126 = scalar_lea.vmem [#allocation3], %s125
        %p127 = pneg %p39
        %p128 = pneg %p36
        %p129 = pneg %p65
        %p130 = pneg %p62
        %s131 = sand.u32 %s52, 1
        %s132 = scalar_lea.sflag [#allocation5], %s131
        %s133 = sand.u32 %s52, 1
        %s134 = smul.addr %s133, 32
        %s135 = scalar_lea.vmem [#allocation6], %s134
        %s136 = smul.u32 4, %s18
        %s137 = smul.u32 4, %s18
        %v138 = vld [vmem:[%s117] ss:$2 sm:$0xff]
        %s139 = scalar_lea.vmem %s117, 16 [#allocation3]
        %v140 = vld [vmem:[%s139] ss:$2 sm:$0xff]
        %s141 = scalar_lea.vmem %s117, 32 [#allocation3]
        %v142 = vld [vmem:[%s141] ss:$2 sm:$0xff]
        %s143 = scalar_lea.vmem %s117, 48 [#allocation3]
        %v144 = vld [vmem:[%s143] ss:$2 sm:$0xff]
        %s145 = scalar_lea.vmem %s117, 1 [#allocation3]
        %v146 = vld [vmem:[%s145] ss:$2 sm:$0xff]
        %s147 = scalar_lea.vmem %s117, 17 [#allocation3]
        %v148 = vld [vmem:[%s147] ss:$2 sm:$0xff]
        %s149 = scalar_lea.vmem %s117, 33 [#allocation3]
        %v150 = vld [vmem:[%s149] ss:$2 sm:$0xff]
        %s151 = scalar_lea.vmem %s117, 49 [#allocation3]
        %v152 = vld [vmem:[%s151] ss:$2 sm:$0xff]
        %v153 = vmax.f32 %v138, %v146
        %v154 = vmax.f32 %v140, %v148
        %v155 = vmax.f32 %v142, %v150
        %v156 = vmax.f32 %v144, %v152
        %157 = vxpose.xlu0.b32.start [1/16] %v153, 128
        %158 = vxpose.xlu0.b32.cont [2/16] %v154, 128
        %159 = vxpose.xlu0.b32.cont [3/16] %v155, 128
        %160 = vxpose.xlu0.b32.cont [4/16] %v156, 128
        %161 = vxpose.xlu0.b32.cont [5/16] 0.0, 128
        %162 = vxpose.xlu0.b32.cont [6/16] 0.0, 128
        %163 = vxpose.xlu0.b32.cont [7/16] 0.0, 128
        %164 = vxpose.xlu0.b32.cont [8/16] 0.0, 128
        %165 = vxpose.xlu0.b32.cont [9/16] 0.0, 128
        %166 = vxpose.xlu0.b32.cont [10/16] 0.0, 128
        %167 = vxpose.xlu0.b32.cont [11/16] 0.0, 128
        %168 = vxpose.xlu0.b32.cont [12/16] 0.0, 128
        %169 = vxpose.xlu0.b32.cont [13/16] 0.0, 128
        %170 = vxpose.xlu0.b32.cont [14/16] 0.0, 128
        %171 = vxpose.xlu0.b32.cont [15/16] 0.0, 128
        %172 = vxpose.xlu0.b32.end [16/16] 0.0, 128
        %v173 = vpop.trf.xlu0
        %v174 = vpop.trf.xlu0
        %v175 = vpop.trf.xlu0
        %v176 = vpop.trf.xlu0
        %v177 = vpop.trf.xlu0
        %v178 = vpop.trf.xlu0
        %v179 = vpop.trf.xlu0
        %v180 = vpop.trf.xlu0
        %v181 = vpop.trf.xlu0
        %v182 = vpop.trf.xlu0
        %v183 = vpop.trf.xlu0
        %v184 = vpop.trf.xlu0
        %v185 = vpop.trf.xlu0
        %v186 = vpop.trf.xlu0
        %v187 = vpop.trf.xlu0
        %v188 = vpop.trf.xlu0
        %vm189 = vcmask 261120
        %190 = vst.msk [vmem:[#allocation2] sm:$0xff] %vm189, %v173
        %191 = vst.msk [vmem:[#allocation2 + $0x8] sm:$0xff] %vm189, %v174
        %v192 = vld [vmem:[#allocation2] ss:$2 sm:$0xff]
        %s193 = scalar_lea.vmem [#allocation2], 1
        %v194 = vld [vmem:[%s193] ss:$2 sm:$0xff]
        %v195 = vmax.f32 %v192, %v194
        %196 = vxpose.xlu0.b32.start [1/16] %v195, 128
        %197 = vxpose.xlu0.b32.cont [2/16] 0.0, 128
        %198 = vxpose.xlu0.b32.cont [3/16] 0.0, 128
        %199 = vxpose.xlu0.b32.cont [4/16] 0.0, 128
        %200 = vxpose.xlu0.b32.cont [5/16] 0.0, 128
        %201 = vxpose.xlu0.b32.cont [6/16] 0.0, 128
        %202 = vxpose.xlu0.b32.cont [7/16] 0.0, 128
        %203 = vxpose.xlu0.b32.cont [8/16] 0.0, 128
        %204 = vxpose.xlu0.b32.cont [9/16] 0.0, 128
        %205 = vxpose.xlu0.b32.cont [10/16] 0.0, 128
        %206 = vxpose.xlu0.b32.cont [11/16] 0.0, 128
        %207 = vxpose.xlu0.b32.cont [12/16] 0.0, 128
        %208 = vxpose.xlu0.b32.cont [13/16] 0.0, 128
        %209 = vxpose.xlu0.b32.cont [14/16] 0.0, 128
        %210 = vxpose.xlu0.b32.cont [15/16] 0.0, 128
        %211 = vxpose.xlu0.b32.end [16/16] 0.0, 128
        %v212 = vpop.trf.xlu0
        %v213 = vpop.trf.xlu0
        %v214 = vpop.trf.xlu0
        %v215 = vpop.trf.xlu0
        %v216 = vpop.trf.xlu0
        %v217 = vpop.trf.xlu0
        %v218 = vpop.trf.xlu0
        %v219 = vpop.trf.xlu0
        %v220 = vpop.trf.xlu0
        %v221 = vpop.trf.xlu0
        %v222 = vpop.trf.xlu0
        %v223 = vpop.trf.xlu0
        %v224 = vpop.trf.xlu0
        %v225 = vpop.trf.xlu0
        %v226 = vpop.trf.xlu0
        %v227 = vpop.trf.xlu0
        %vm228 = vcmask 64512
        %229 = vst.msk [vmem:[%s135] sm:$0xff] %vm228, %v212
        %230 = vst.msk [vmem:[%s135 + $0x8] sm:$0xff] %vm228, %v213
        %231 = vst.msk [vmem:[%s135 + $0x10] sm:$0xff] %vm228, %v214
        %232 = vst.msk [vmem:[%s135 + $0x18] sm:$0xff] %vm228, %v215
        %s233 = sand.u32 %s52, 1
        %s234 = scalar_lea.sflag [#allocation5], %s233
        %s235 = sand.u32 %s52, 1
        %s236 = smul.addr %s235, 32
        %s237 = scalar_lea.vmem [#allocation6], %s236
        // Predicated region
        $region29: #{tpu_custom_call.1} parent=23 // pred_check
          %p238 = pneg %p62
        $region30: #{tpu_custom_call.1} parent=23 // pred_check_branch
          %240 = sbr.rel (%p238) target = $region32
        $region31: #{tpu_custom_call.1} parent=23 // pred_region
          %s241 = smul.u32 4, %s18
          %s243 = ssub.s32 512, 512
          %244 = vsyncadd %s234, %s243
          %s245 = smul.addr %s241, 128
          %s246 = scalar_lea.hbm %s1, %s245
          %s247 = sshll.u32 %s237, 4
          %s248 = int_to_ptr.vmem [resolvable:$true] %s247
          %253 = dma.vmem_to_hbm [thread:$0]  %s248, 512, %s246, %s234, 128, 128, 8
        $region32: #{tpu_custom_call.1} parent=23 // pred_fallthru
          _
      $region24: #{tpu_custom_call.1} parent=5 // pred_fallthru
        _
      %p254 = scmp.le.s32.totalorder 2, %s13
      // Predicated region
      $region33: #{tpu_custom_call.1} parent=5 // pred_check
        %p255 = pneg %p254
      $region34: #{tpu_custom_call.1} parent=5 // pred_check_branch
        %257 = sbr.rel (%p255) target = $region36
      $region35: #{tpu_custom_call.1} parent=5 // pred_region
        %s258 = ssub.s32 %s13, 2
        // Predicated region
        $region37: #{tpu_custom_call.1} parent=35 // pred_check
          %p259 = pneg %p68
        $region38: #{tpu_custom_call.1} parent=35 // pred_check_branch
          %261 = sbr.rel (%p259) target = $region40
        $region39: #{tpu_custom_call.1} parent=35 // pred_region
          %s262 = sand.u32 %s53, 1
          %s263 = scalar_lea.sflag [#allocation5], %s262
          %s264 = sand.u32 %s53, 1
          %s265 = smul.addr %s264, 32
          %s266 = scalar_lea.vmem [#allocation6], %s265
          %267 = dma.done %s263, 512
        $region40: #{tpu_custom_call.1} parent=35 // pred_fallthru
          _
      $region36: #{tpu_custom_call.1} parent=5 // pred_fallthru
        _
    $region6: #{tpu_custom_call.1} parent=1 // loop_footer
      %s17 = sadd.s32 1, %s13
    $region7: #{tpu_custom_call.1} parent=1 // loop_footer_branch
      %12 = sbr.rel target = $region3
    $region8: #{tpu_custom_call.1} parent=1 // loop_exit
      _
    %268 = vsyncpa [#allocation4], 1
    %s269 = scalar_lea.sflag [#allocation4], 1
    %270 = vsyncpa %s269, 1
    %271 = vsyncpa [#allocation5], 1
    %s272 = scalar_lea.sflag [#allocation5], 1
    %273 = vsyncpa %s272, 1

</llo_original>
